<compile_context>
chip_gen: v6e
topology: v6e:2x2x1
jax: 0.10.0
libtpu: 0.0.40
codegen_flags: <defaults>
</compile_context>

<pallas_src>
import functools

import jax
import jax.numpy as jnp
from jax.experimental import pallas as pl
from jax.experimental.pallas import tpu as pltpu

_LANE = 128
_NEG_BIAS = -1e30  # padded logit columns -> exp underflows to exactly 0 under softmax


def mlp_kernel(x_ref, w1t_ref, b1_ref, w2t_ref, b2_ref, o_ref):
    # fc1: (B, Ip) @ (Ip, Hp) + (1, Hp), then ReLU. Weights arrive pre-transposed,
    # so the MXU consumes them directly (no in-kernel transpose).
    h = jnp.dot(x_ref[...], w1t_ref[...], preferred_element_type=jnp.float32)
    h = jnp.maximum(h + b1_ref[...], 0.0)
    # fc2: (B, Hp) @ (Hp, Op) + (1, Op). Padded output columns carry a -1e30 bias.
    logits = jnp.dot(h, w2t_ref[...], preferred_element_type=jnp.float32) + b2_ref[...]
    # Numerically stable softmax over the feature axis. Exact division: the VPU/EUP
    # slots are idle here, so the approx reciprocal would be pure accuracy loss.
    m = jnp.max(logits, axis=1, keepdims=True)
    e = jnp.exp(logits - m)
    denom = jnp.sum(e, axis=1, keepdims=True)
    o_ref[...] = (e / denom).astype(o_ref.dtype)


def _round_up(n, m):
    return ((n + m - 1) // m) * m


def prepare_params(w1, b1, w2, b2):
    """One-time layout plumbing for torch-layout weights: w1 (H, I), w2 (O, H).

    Returns lane-dense, pre-transposed, padded tiles that can be reused across
    every forward call (pre-transpose + pad happen exactly once).
    """
    hidden, in_size = w1.shape
    out_size = w2.shape[0]
    ip = _round_up(in_size, _LANE)
    hp = _round_up(hidden, _LANE)
    op = _round_up(out_size, _LANE)

    w1t = jnp.pad(w1.T, ((0, ip - in_size), (0, hp - hidden)))            # (Ip, Hp), zeros
    b1p = jnp.pad(b1[None, :], ((0, 0), (0, hp - hidden)))                # (1, Hp), zeros
    w2t = jnp.pad(w2.T, ((0, hp - hidden), (0, op - out_size)))           # (Hp, Op), zeros
    b2p = jnp.pad(b2[None, :], ((0, 0), (0, op - out_size)),
                  constant_values=_NEG_BIAS)                              # (1, Op)
    return (w1t, b1p, w2t, b2p), (in_size, out_size)


@functools.partial(jax.jit, static_argnames=("in_size", "out_size"))
def mlp_forward(x, w1t, b1p, w2t, b2p, *, in_size, out_size):
    """Fused fc1 -> ReLU -> fc2 -> softmax on pre-prepared (padded/transposed) params.

    Input pad, pallas_call, and output slice all live in this single jit, so the
    layout plumbing fuses around the custom call instead of dispatching separately.
    """
    batch = x.shape[0]
    ip = w1t.shape[0]
    op = w2t.shape[1]

    xp = jnp.pad(x, ((0, 0), (0, ip - in_size)))                          # (B, Ip)

    vmem = pl.BlockSpec(memory_space=pltpu.MemorySpace.VMEM)
    out_padded = pl.pallas_call(
        mlp_kernel,
        out_shape=jax.ShapeDtypeStruct((batch, op), jnp.float32),
        in_specs=[vmem, vmem, vmem, vmem, vmem],
        out_specs=vmem,
    )(xp, w1t, b1p, w2t, b2p)
    # TODO(synk): if batch is scaled up, add a leading batch grid axis with
    # dimension_semantics=("parallel",) (2 TCs on v7x), 128/256-row tiles sized for
    # v7x's 64 MiB VMEM, and feed the MXU bf16 operands (f32 accumulate) on v6e/v7x.
    return out_padded[:, :out_size]


def init_params(key, input_size, hidden_size, output_size):
    # Deterministic init mimicking torch.nn.Linear defaults (uniform in +-1/sqrt(fan_in)).
    k1, k2, k3, k4 = jax.random.split(key, 4)
    lim1 = 1.0 / jnp.sqrt(jnp.float32(input_size))
    lim2 = 1.0 / jnp.sqrt(jnp.float32(hidden_size))
    w1 = jax.random.uniform(k1, (hidden_size, input_size), jnp.float32, -lim1, lim1)
    b1 = jax.random.uniform(k2, (hidden_size,), jnp.float32, -lim1, lim1)
    w2 = jax.random.uniform(k3, (output_size, hidden_size), jnp.float32, -lim2, lim2)
    b2 = jax.random.uniform(k4, (output_size,), jnp.float32, -lim2, lim2)
    return w1, b1, w2, b2


if __name__ == "__main__":
    input_size, hidden_size, output_size = 32, 64, 16
    batch = 8

    key = jax.random.PRNGKey(0)
    kx, kp = jax.random.split(key)
    x = jax.random.normal(kx, (batch, input_size), jnp.float32)
    w1, b1, w2, b2 = init_params(kp, input_size, hidden_size, output_size)

    # One-time weight prep (transpose + pad); reused across every forward call.
    (w1t, b1p, w2t, b2p), (isz, osz) = prepare_params(w1, b1, w2, b2)

    out = jax.block_until_ready(
        mlp_forward(x, w1t, b1p, w2t, b2p, in_size=isz, out_size=osz))

    # Sanity check against a pure-JAX reference of the same forward pass.
    h_ref = jnp.maximum(x @ w1.T + b1, 0.0)
    logits_ref = h_ref @ w2.T + b2
    ref = jax.nn.softmax(logits_ref, axis=1)
    assert out.shape == (batch, output_size)
    assert jnp.allclose(out, ref, atol=1e-5, rtol=1e-5)
    assert jnp.allclose(jnp.sum(out, axis=1), 1.0, atol=1e-5)

    print("KERNEL_OK")
</pallas_src>

<mosaic_0001>
module attributes {stable_mosaic.version = 11 : i64} {
  func.func @mlp_kernel(%arg0: memref<8x128xf32, #tpu.memory_space<vmem>>, %arg1: memref<128x128xf32, #tpu.memory_space<vmem>>, %arg2: memref<1x128xf32, #tpu.memory_space<vmem>>, %arg3: memref<128x128xf32, #tpu.memory_space<vmem>>, %arg4: memref<1x128xf32, #tpu.memory_space<vmem>>, %arg5: memref<8x128xf32, #tpu.memory_space<vmem>>) attributes {dimension_semantics = [], scalar_prefetch = 0 : i64, scratch_operands = 0 : i64, tpu.core_type = #tpu.core_type<tc>} {
    %c0 = arith.constant 0 : index
    %c0_0 = arith.constant 0 : index
    %0 = vector.load %arg0[%c0, %c0_0] : memref<8x128xf32, #tpu.memory_space<vmem>>, vector<8x128xf32>
    %c0_1 = arith.constant 0 : index
    %c0_2 = arith.constant 0 : index
    %1 = vector.load %arg1[%c0_1, %c0_2] : memref<128x128xf32, #tpu.memory_space<vmem>>, vector<128x128xf32>
    %cst = arith.constant dense<0.000000e+00> : vector<8x128xf32>
    %2 = tpu.matmul %0, %1, %cst {dimension_numbers = #tpu.dot_dimension_numbers<[1], [0], [0], [1], [0, 0, 1, 1], [], []>} : vector<8x128xf32>, vector<128x128xf32>, vector<8x128xf32> -> vector<8x128xf32>
    %c0_3 = arith.constant 0 : index
    %c0_4 = arith.constant 0 : index
    %3 = vector.load %arg2[%c0_3, %c0_4] : memref<1x128xf32, #tpu.memory_space<vmem>>, vector<1x128xf32>
    %4 = vector.broadcast %3 : vector<1x128xf32> to vector<8x128xf32>
    %5 = arith.addf %2, %4 : vector<8x128xf32>
    %cst_5 = arith.constant 0.000000e+00 : f32
    %6 = vector.broadcast %cst_5 : f32 to vector<8x128xf32>
    %7 = arith.maximumf %5, %6 : vector<8x128xf32>
    %c0_6 = arith.constant 0 : index
    %c0_7 = arith.constant 0 : index
    %8 = vector.load %arg3[%c0_6, %c0_7] : memref<128x128xf32, #tpu.memory_space<vmem>>, vector<128x128xf32>
    %cst_8 = arith.constant dense<0.000000e+00> : vector<8x128xf32>
    %9 = tpu.matmul %7, %8, %cst_8 {dimension_numbers = #tpu.dot_dimension_numbers<[1], [0], [0], [1], [0, 0, 1, 1], [], []>} : vector<8x128xf32>, vector<128x128xf32>, vector<8x128xf32> -> vector<8x128xf32>
    %c0_9 = arith.constant 0 : index
    %c0_10 = arith.constant 0 : index
    %10 = vector.load %arg4[%c0_9, %c0_10] : memref<1x128xf32, #tpu.memory_space<vmem>>, vector<1x128xf32>
    %11 = vector.broadcast %10 : vector<1x128xf32> to vector<8x128xf32>
    %12 = arith.addf %9, %11 : vector<8x128xf32>
    %cst_11 = arith.constant dense<0xFF800000> : vector<8xf32>
    %13 = vector.multi_reduction <maximumf>, %12, %cst_11 [1] : vector<8x128xf32> to vector<8xf32>
    %14 = vector.shape_cast %13 : vector<8xf32> to vector<8x1xf32>
    %15 = vector.broadcast %14 : vector<8x1xf32> to vector<8x128xf32>
    %16 = arith.subf %12, %15 : vector<8x128xf32>
    %17 = math.exp %16 : vector<8x128xf32>
    %cst_12 = arith.constant dense<0.000000e+00> : vector<8xf32>
    %18 = vector.multi_reduction <add>, %17, %cst_12 [1] : vector<8x128xf32> to vector<8xf32>
    %19 = vector.shape_cast %18 : vector<8xf32> to vector<8x1xf32>
    %20 = vector.broadcast %19 : vector<8x1xf32> to vector<8x128xf32>
    %21 = arith.divf %17, %20 : vector<8x128xf32>
    %c0_13 = arith.constant 0 : index
    %c0_14 = arith.constant 0 : index
    %22 = vector.load %arg5[%c0_13, %c0_14] : memref<8x128xf32, #tpu.memory_space<vmem>>, vector<8x128xf32>
    tpu.vector_store %arg5[%c0_13, %c0_14], %21 {strides = array<i32>} : memref<8x128xf32, #tpu.memory_space<vmem>>, vector<8x128xf32>,
    return
  }
}

</mosaic_0001>

<llo_original>
// kernel: mlp_forward.1
$region0: #{mlp_forward.1}
  #allocation0 [shape = 'u32[]', space=smem, size = 0x4, offset = 0x4, fixed_abs, tag = 'smem constant byte address 0x4 - core index']
  #allocation1 [shape = 'u32[144,128]{1,0:T(1,128)}', space=vmem, size = 0x12000, scoped, tag = 'internal scratch']
  %s0 = inlined_call_operand.vmem [shape: f32[8,128], index: 0, kind: input, shape index: {}]
  %s1 = inlined_call_operand.hbm [shape: f32[128,128], index: 1, kind: input, shape index: {}]
  %s2 = inlined_call_operand.vmem [shape: f32[1,128], index: 2, kind: input, shape index: {}]
  %s3 = inlined_call_operand.hbm [shape: f32[128,128], index: 3, kind: input, shape index: {}]
  %s4 = inlined_call_operand.vmem [shape: f32[1,128], index: 4, kind: input, shape index: {}]
  %s5 = inlined_call_operand.hbm [shape: f32[8,128], index: 5, kind: output, shape index: {}]
  %s6 = sld [smem:[#allocation0]]
  $region38: #{mlp_forward.1} parent=0
    _
  %s8 = ssub.s32 1, %s6
  %s9 = scalar_select 0, %s8, %s6
  $region1: #{mlp_forward.1} parent=0
    #allocation2 [shape = 'u8[65536]{0}', space=vmem, size = 0x10000, scoped, tag = 'input window, operand 1, single buffered']
    #allocation3 [shape = 's32[1]{0}', space=sflag, size = 0x4, scoped, tag = 'scoped memory for mlp_forward.1']
    #allocation4 [shape = 's32[1]{0}', space=sflag, size = 0x4, scoped, tag = 'scoped memory for mlp_forward.1']
    #allocation5 [shape = 'u8[65536]{0}', space=vmem, size = 0x10000, scoped, tag = 'input window, operand 3, single buffered']
    #allocation6 [shape = 's32[1]{0}', space=sflag, size = 0x4, scoped, tag = 'scoped memory for mlp_forward.1']
    #allocation7 [shape = 'u8[4096]{0}', space=vmem, size = 0x1000, scoped, tag = 'output window, operand 0, single buffered']
    %10 = vsyncpa [#allocation3], 0
    %11 = vsyncpa [#allocation6], 0
    %12 = vsyncpa [#allocation4], 0
    // Predicated region
    $region2: #{mlp_forward.1} parent=1 // pred_check
      _
    $region3: #{mlp_forward.1} parent=1 // pred_check_branch
      %14 = sbr.rel (0) target = $region5
    $region4: #{mlp_forward.1} parent=1 // pred_region
      _
    $region5: #{mlp_forward.1} parent=1 // pred_fallthru
      _
    // Predicated region
    $region6: #{mlp_forward.1} parent=1 // pred_check
      _
    $region7: #{mlp_forward.1} parent=1 // pred_check_branch
      %16 = sbr.rel (0) target = $region9
    $region8: #{mlp_forward.1} parent=1 // pred_region
      %s18 = ssub.s32 2048, 2048
      %19 = vsyncadd [#allocation3], %s18
      %s20 = sshll.u32 [#allocation2], 4
      %s21 = int_to_ptr.vmem [resolvable:$true] %s20
      %26 = dma.hbm_to_vmem [thread:$0]  %s1, 2048, %s21, [#allocation3], 128, 128, 8
    $region9: #{mlp_forward.1} parent=1 // pred_fallthru
      _
    // Predicated region
    $region10: #{mlp_forward.1} parent=1 // pred_check
      _
    $region11: #{mlp_forward.1} parent=1 // pred_check_branch
      %28 = sbr.rel (0) target = $region13
    $region12: #{mlp_forward.1} parent=1 // pred_region
      _
    $region13: #{mlp_forward.1} parent=1 // pred_fallthru
      _
    // Predicated region
    $region14: #{mlp_forward.1} parent=1 // pred_check
      _
    $region15: #{mlp_forward.1} parent=1 // pred_check_branch
      %30 = sbr.rel (0) target = $region17
    $region16: #{mlp_forward.1} parent=1 // pred_region
      %s32 = ssub.s32 2048, 2048
      %33 = vsyncadd [#allocation6], %s32
      %s34 = sshll.u32 [#allocation5], 4
      %s35 = int_to_ptr.vmem [resolvable:$true] %s34
      %40 = dma.hbm_to_vmem [thread:$0]  %s3, 2048, %s35, [#allocation6], 128, 128, 8
    $region17: #{mlp_forward.1} parent=1 // pred_fallthru
      _
    // Predicated region
    $region18: #{mlp_forward.1} parent=1 // pred_check
      _
    $region19: #{mlp_forward.1} parent=1 // pred_check_branch
      %42 = sbr.rel (0) target = $region21
    $region20: #{mlp_forward.1} parent=1 // pred_region
      _
    $region21: #{mlp_forward.1} parent=1 // pred_fallthru
      _
    // Predicated region
    $region22: #{mlp_forward.1} parent=1 // pred_check
      _
    $region23: #{mlp_forward.1} parent=1 // pred_check_branch
      %44 = sbr.rel (0) target = $region25
    $region24: #{mlp_forward.1} parent=1 // pred_region
      %45 = dma.done [#allocation3], 2048
    $region25: #{mlp_forward.1} parent=1 // pred_fallthru
      _
    // Predicated region
    $region26: #{mlp_forward.1} parent=1 // pred_check
      _
    $region27: #{mlp_forward.1} parent=1 // pred_check_branch
      %47 = sbr.rel (0) target = $region29
    $region28: #{mlp_forward.1} parent=1 // pred_region
      %48 = dma.done [#allocation6], 2048
    $region29: #{mlp_forward.1} parent=1 // pred_fallthru
      _
    %v49 = vld [vmem:[%s0] sm:$0xff]
    %v50 = vld [vmem:[#allocation2] sm:$0xff]
    %v51 = vld [vmem:[#allocation2 + $0x8] sm:$0xff]
    %v52 = vld [vmem:[#allocation2 + $0x10] sm:$0xff]
    %v53 = vld [vmem:[#allocation2 + $0x18] sm:$0xff]
    %v54 = vld [vmem:[#allocation2 + $0x20] sm:$0xff]
    %v55 = vld [vmem:[#allocation2 + $0x28] sm:$0xff]
    %v56 = vld [vmem:[#allocation2 + $0x30] sm:$0xff]
    %v57 = vld [vmem:[#allocation2 + $0x38] sm:$0xff]
    %v58 = vld [vmem:[#allocation2 + $0x40] sm:$0xff]
    %v59 = vld [vmem:[#allocation2 + $0x48] sm:$0xff]
    %v60 = vld [vmem:[#allocation2 + $0x50] sm:$0xff]
    %v61 = vld [vmem:[#allocation2 + $0x58] sm:$0xff]
    %v62 = vld [vmem:[#allocation2 + $0x60] sm:$0xff]
    %v63 = vld [vmem:[#allocation2 + $0x68] sm:$0xff]
    %v64 = vld [vmem:[#allocation2 + $0x70] sm:$0xff]
    %v65 = vld [vmem:[#allocation2 + $0x78] sm:$0xff]
    %v66 = vld [vmem:[%s2] sm:$0x1]
    %v68 = vlaneseq
    %v69 = vshrl.u32 %v68, 7
    %v70 = vsub.s32 0, %v69
    %v71 = vrot.slane %v66, %v70
    %73 = vmatprep.subr.mxu0 0.0
    %74 = vmatpush1.msra.mxu0 %v65
    %75 = vmatprep.subr.mxu0 0.0
    %76 = vmatpush1.msra.mxu0 %v64
    %77 = vmatprep.subr.mxu0 0.0
    %78 = vmatpush1.msra.mxu0 %v63
    %79 = vmatprep.subr.mxu0 0.0
    %80 = vmatpush1.msra.mxu0 %v62
    %81 = vmatprep.subr.mxu0 0.0
    %82 = vmatpush1.msra.mxu0 %v61
    %83 = vmatprep.subr.mxu0 0.0
    %84 = vmatpush1.msra.mxu0 %v60
    %85 = vmatprep.subr.mxu0 0.0
    %86 = vmatpush1.msra.mxu0 %v59
    %87 = vmatprep.subr.mxu0 0.0
    %88 = vmatpush1.msra.mxu0 %v58
    %89 = vmatprep.subr.mxu0 0.0
    %90 = vmatpush1.msra.mxu0 %v57
    %91 = vmatprep.subr.mxu0 0.0
    %92 = vmatpush1.msra.mxu0 %v56
    %93 = vmatprep.subr.mxu0 0.0
    %94 = vmatpush1.msra.mxu0 %v55
    %95 = vmatprep.subr.mxu0 0.0
    %96 = vmatpush1.msra.mxu0 %v54
    %97 = vmatprep.subr.mxu0 0.0
    %98 = vmatpush1.msra.mxu0 %v53
    %99 = vmatprep.subr.mxu0 0.0
    %100 = vmatpush1.msra.mxu0 %v52
    %101 = vmatprep.subr.mxu0 0.0
    %102 = vmatpush1.msra.mxu0 %v51
    %103 = vmatprep.subr.mxu0 0.0
    %104 = vmatpush1.msra.mxu0 %v50
    %105 = vmatprep.subr.mxu0 0.0
    %106 = vmatpush2.msra.mxu0 0.0
    %107 = vmatprep.subr.mxu0 0.0
    %108 = vmatpush2.msra.mxu0 0.0
    %109 = vmatprep.subr.mxu0 0.0
    %110 = vmatpush2.msra.mxu0 0.0
    %111 = vmatprep.subr.mxu0 0.0
    %112 = vmatpush2.msra.mxu0 0.0
    %113 = vmatprep.subr.mxu0 0.0
    %114 = vmatpush2.msra.mxu0 0.0
    %115 = vmatprep.subr.mxu0 0.0
    %116 = vmatpush2.msra.mxu0 0.0
    %117 = vmatprep.subr.mxu0 0.0
    %118 = vmatpush2.msra.mxu0 0.0
    %119 = vmatprep.subr.mxu0 0.0
    %120 = vmatpush2.msra.mxu0 0.0
    %121 = vmatprep.subr.mxu0 0.0
    %122 = vmatpush2.msra.mxu0 0.0
    %123 = vmatprep.subr.mxu0 0.0
    %124 = vmatpush2.msra.mxu0 0.0
    %125 = vmatprep.subr.mxu0 0.0
    %126 = vmatpush2.msra.mxu0 0.0
    %127 = vmatprep.subr.mxu0 0.0
    %128 = vmatpush2.msra.mxu0 0.0
    %129 = vmatprep.subr.mxu0 0.0
    %130 = vmatpush2.msra.mxu0 0.0
    %131 = vmatprep.subr.mxu0 0.0
    %132 = vmatpush2.msra.mxu0 0.0
    %133 = vmatprep.subr.mxu0 0.0
    %134 = vmatpush2.msra.mxu0 0.0
    %135 = vmatprep.subr.mxu0 0.0
    %136 = vmatpush2.msra.mxu0 0.0
    %137 = vmatprep.mubr.f32.mxu0 0.0
    %138 = vmatmul.mubr.f32.gmra.mxu0 %v49
    %v139 = vpop.f32.mrf.mxu0
    %v140 = vadd.f32 %v71, %v139
    %v141 = vpop.f32.mrf.mxu0
    %142 = vdwg.mxu0
    %v143 = vmax.f32 %v140, 0.0
    %v144 = vld [vmem:[#allocation5] sm:$0xff]
    %v145 = vld [vmem:[#allocation5 + $0x8] sm:$0xff]
    %v146 = vld [vmem:[#allocation5 + $0x10] sm:$0xff]
    %v147 = vld [vmem:[#allocation5 + $0x18] sm:$0xff]
    %v148 = vld [vmem:[#allocation5 + $0x20] sm:$0xff]
    %v149 = vld [vmem:[#allocation5 + $0x28] sm:$0xff]
    %v150 = vld [vmem:[#allocation5 + $0x30] sm:$0xff]
    %v151 = vld [vmem:[#allocation5 + $0x38] sm:$0xff]
    %v152 = vld [vmem:[#allocation5 + $0x40] sm:$0xff]
    %v153 = vld [vmem:[#allocation5 + $0x48] sm:$0xff]
    %v154 = vld [vmem:[#allocation5 + $0x50] sm:$0xff]
    %v155 = vld [vmem:[#allocation5 + $0x58] sm:$0xff]
    %v156 = vld [vmem:[#allocation5 + $0x60] sm:$0xff]
    %v157 = vld [vmem:[#allocation5 + $0x68] sm:$0xff]
    %v158 = vld [vmem:[#allocation5 + $0x70] sm:$0xff]
    %v159 = vld [vmem:[#allocation5 + $0x78] sm:$0xff]
    %v160 = vld [vmem:[%s4] sm:$0x1]
    %v162 = vlaneseq
    %v163 = vshrl.u32 %v162, 7
    %v164 = vsub.s32 0, %v163
    %v165 = vrot.slane %v160, %v164
    %167 = vmatprep.subr.mxu0 0.0
    %168 = vmatpush1.msra.mxu0 %v159
    %169 = vmatprep.subr.mxu0 0.0
    %170 = vmatpush1.msra.mxu0 %v158
    %171 = vmatprep.subr.mxu0 0.0
    %172 = vmatpush1.msra.mxu0 %v157
    %173 = vmatprep.subr.mxu0 0.0
    %174 = vmatpush1.msra.mxu0 %v156
    %175 = vmatprep.subr.mxu0 0.0
    %176 = vmatpush1.msra.mxu0 %v155
    %177 = vmatprep.subr.mxu0 0.0
    %178 = vmatpush1.msra.mxu0 %v154
    %179 = vmatprep.subr.mxu0 0.0
    %180 = vmatpush1.msra.mxu0 %v153
    %181 = vmatprep.subr.mxu0 0.0
    %182 = vmatpush1.msra.mxu0 %v152
    %183 = vmatprep.subr.mxu0 0.0
    %184 = vmatpush1.msra.mxu0 %v151
    %185 = vmatprep.subr.mxu0 0.0
    %186 = vmatpush1.msra.mxu0 %v150
    %187 = vmatprep.subr.mxu0 0.0
    %188 = vmatpush1.msra.mxu0 %v149
    %189 = vmatprep.subr.mxu0 0.0
    %190 = vmatpush1.msra.mxu0 %v148
    %191 = vmatprep.subr.mxu0 0.0
    %192 = vmatpush1.msra.mxu0 %v147
    %193 = vmatprep.subr.mxu0 0.0
    %194 = vmatpush1.msra.mxu0 %v146
    %195 = vmatprep.subr.mxu0 0.0
    %196 = vmatpush1.msra.mxu0 %v145
    %197 = vmatprep.subr.mxu0 0.0
    %198 = vmatpush1.msra.mxu0 %v144
    %199 = vmatprep.subr.mxu0 0.0
    %200 = vmatpush2.msra.mxu0 0.0
    %201 = vmatprep.subr.mxu0 0.0
    %202 = vmatpush2.msra.mxu0 0.0
    %203 = vmatprep.subr.mxu0 0.0
    %204 = vmatpush2.msra.mxu0 0.0
    %205 = vmatprep.subr.mxu0 0.0
    %206 = vmatpush2.msra.mxu0 0.0
    %207 = vmatprep.subr.mxu0 0.0
    %208 = vmatpush2.msra.mxu0 0.0
    %209 = vmatprep.subr.mxu0 0.0
    %210 = vmatpush2.msra.mxu0 0.0
    %211 = vmatprep.subr.mxu0 0.0
    %212 = vmatpush2.msra.mxu0 0.0
    %213 = vmatprep.subr.mxu0 0.0
    %214 = vmatpush2.msra.mxu0 0.0
    %215 = vmatprep.subr.mxu0 0.0
    %216 = vmatpush2.msra.mxu0 0.0
    %217 = vmatprep.subr.mxu0 0.0
    %218 = vmatpush2.msra.mxu0 0.0
    %219 = vmatprep.subr.mxu0 0.0
    %220 = vmatpush2.msra.mxu0 0.0
    %221 = vmatprep.subr.mxu0 0.0
    %222 = vmatpush2.msra.mxu0 0.0
    %223 = vmatprep.subr.mxu0 0.0
    %224 = vmatpush2.msra.mxu0 0.0
    %225 = vmatprep.subr.mxu0 0.0
    %226 = vmatpush2.msra.mxu0 0.0
    %227 = vmatprep.subr.mxu0 0.0
    %228 = vmatpush2.msra.mxu0 0.0
    %229 = vmatprep.subr.mxu0 0.0
    %230 = vmatpush2.msra.mxu0 0.0
    %231 = vmatprep.mubr.f32.mxu0 0.0
    %232 = vmatmul.mubr.f32.gmra.mxu0 %v143
    %v233 = vpop.f32.mrf.mxu0
    %v234 = vadd.f32 %v165, %v233
    %v235 = vpop.f32.mrf.mxu0
    %236 = vdwg.mxu0
    %237 = vmax.xlane.f32.xlu0 %v234
    %v238 = vpop.xlane.xlu0 %237
    %v239 = vsub.f32 %v234, %v238
    %v240 = vmul.f32 %v239, 1.442695
    %v241 = vpow.pop %v240
    %242 = vadd.xlane.f32.xlu0 %v241
    %v243 = vpop.xlane.xlu0 %242
    %v244 = vrcp.pop %v243
    %v245 = vmul.f32 %v241, %v244
    %246 = vst [vmem:[#allocation7] sm:$0xff] %v245
    // Predicated region
    $region30: #{mlp_forward.1} parent=1 // pred_check
      _
    $region31: #{mlp_forward.1} parent=1 // pred_check_branch
      %248 = sbr.rel (0) target = $region33
    $region32: #{mlp_forward.1} parent=1 // pred_region
      %s250 = ssub.s32 128, 128
      %251 = vsyncadd [#allocation4], %s250
      %s253 = sshll.u32 [#allocation7], 4
      %s254 = int_to_ptr.vmem [resolvable:$true] %s253
      %256 = dma.vmem_to_hbm [thread:$0]  %s254, 128, %s5, [#allocation4]
    $region33: #{mlp_forward.1} parent=1 // pred_fallthru
      _
    // Predicated region
    $region34: #{mlp_forward.1} parent=1 // pred_check
      _
    $region35: #{mlp_forward.1} parent=1 // pred_check_branch
      %258 = sbr.rel (0) target = $region37
    $region36: #{mlp_forward.1} parent=1 // pred_region
      %259 = dma.done [#allocation4], 128
    $region37: #{mlp_forward.1} parent=1 // pred_fallthru
      _
    %260 = vsyncpa [#allocation3], 1
    %261 = vsyncpa [#allocation6], 1
    %262 = vsyncpa [#allocation4], 1

</llo_original>
